<compile_context>
chip_gen: v7x
topology: tpu7x:2x2x1
jax: 0.10.0
libtpu: 0.0.40
codegen_flags: <defaults>
</compile_context>

<pallas_src>
import math
import numpy as np
import jax
import jax.numpy as jnp
from jax.experimental import pallas as pl
from jax.experimental.pallas import tpu as pltpu

# ----------------------------- dims ------------------------------------------
D_W = 32          # d_w  (word / op embedding dim)
D_C = 32          # d_c  (concept dim)
D_O = 32          # d_o  (object feature dim; must equal d_c for X @ P)
D_A = 16          # d_a  (unused in this forward)
D_K = 16          # d_k  (unused in this forward)
FFN_DIM = 32      # decoder_ffn_dim
N_VOCAB = 12      # len(prompt_vocab)
PAD_IDX = 1
N_OPS = 2

B = 2
L = 8             # prompt length
N_O = 16          # number of objects
IMG_C, IMG_H, IMG_W = 3, 16, 16
PATCH = 4
PATCH_DIM = IMG_C * PATCH * PATCH   # 48

EPS = 0.0001


# ----------------------------- Pallas kernel ---------------------------------
def f1_kernel(seed_ref, w_ref, b_ref, x_ref, out_ref):
    # seed_ref: (B, d_w)   w_ref: (d_w, d_c)   b_ref: (1, d_c)
    # x_ref:    (B, N_o, d_o)   out_ref: (2, B, N_o)  [channel-major, lane dim N_o]
    #
    # W_concepts: Linear(d_w -> d_c) for all batches in one MXU pass.
    p = jnp.dot(seed_ref[...], w_ref[...],
                preferred_element_type=jnp.float32) + b_ref[...]        # (B, d_c)

    # X_c_logits = sum_d X[b, o, d] * P[b, d]
    # VPU multiply (sublane-broadcast of P over objects) + XLU lane reduction
    # instead of a second, heavily under-filled MXU pass.
    x = x_ref[...]                                                      # (B, N_o, d_o)
    logits = jnp.sum(x * p[:, None, :], axis=-1)                        # (B, N_o)

    xp = jax.nn.sigmoid(logits) * (1.0 - 2.0 * EPS) + EPS               # (B, N_o)
    # x_weights_in is all-ones in ParentModel.forward, so X_w_pred == xp.
    # class_preds[:, :, 0] = 1 - p ; class_preds[:, :, 1] = p ; then log().
    out_ref[0] = jnp.log(1.0 - xp)                                      # channel 0
    out_ref[1] = jnp.log(xp)                                            # channel 1


def f1_pallas(seed, w, b, X):
    """seed: [B, d_w], w: [d_w, d_c], b: [d_c], X: [B, N_o, d_o] -> [B, N_o, 2]."""
    Bsz, n_o, d_o = X.shape
    d_c = w.shape[-1]
    b2 = b.reshape(1, d_c)
    out = pl.pallas_call(
        f1_kernel,
        out_shape=jax.ShapeDtypeStruct((2, Bsz, n_o), jnp.float32),
        in_specs=[
            pl.BlockSpec(memory_space=pltpu.MemorySpace.VMEM),   # seed (B, d_w)
            pl.BlockSpec(memory_space=pltpu.MemorySpace.VMEM),   # W    (d_w, d_c)
            pl.BlockSpec(memory_space=pltpu.MemorySpace.VMEM),   # b    (1, d_c)
            pl.BlockSpec(memory_space=pltpu.MemorySpace.VMEM),   # X    (B, N_o, d_o)
        ],
        out_specs=pl.BlockSpec(memory_space=pltpu.MemorySpace.VMEM),
    )(seed, w, b2, X)
    # channel-major (2, B, N_o) -> (B, N_o, 2); 64 floats, free in XLA.
    return jnp.transpose(out, (1, 2, 0))


# ----------------------------- plain-JAX glue ---------------------------------
def layer_norm(x, g, b, eps=1e-5):
    mu = x.mean(-1, keepdims=True)
    var = ((x - mu) ** 2).mean(-1, keepdims=True)
    return (x - mu) / jnp.sqrt(var + eps) * g + b


def mha(q, kv, wq, wk, wv, wo, key_pad_mask=None):
    Q, K, V = q @ wq, kv @ wk, kv @ wv
    d = Q.shape[-1]
    scores = jnp.einsum('bqd,bkd->bqk', Q, K) / math.sqrt(d)
    if key_pad_mask is not None:
        scores = jnp.where(key_pad_mask[:, None, :], -1e9, scores)
    attn = jax.nn.softmax(scores, axis=-1)
    return jnp.einsum('bqk,bkd->bqd', attn, V) @ wo


# TODO(synk): blocks.TransformerEncoder internals are not provided; this is a
# deterministic 1-layer / 1-head stand-in with the same interface.
def prompt_encoder(p, tokens):
    pad_mask = tokens == PAD_IDX
    x = p['E_c'][tokens] * math.sqrt(D_W)
    h = mha(x, x, p['enc_wq'], p['enc_wk'], p['enc_wv'], p['enc_wo'], pad_mask)
    x = layer_norm(x + h, p['enc_ln1_g'], p['enc_ln1_b'])
    h = jax.nn.relu(x @ p['enc_ff1']) @ p['enc_ff2']
    x = layer_norm(x + h, p['enc_ln2_g'], p['enc_ln2_b'])
    return x, pad_mask


# TODO(synk): blocks.TransformerDecoder internals are not provided; 1-layer /
# 1-head stand-in (self-attn + cross-attn + FFN(32)).
def op_decoder(p, q, mem, mem_pad_mask):
    h = mha(q, q, p['dec_sa_wq'], p['dec_sa_wk'], p['dec_sa_wv'], p['dec_sa_wo'])
    x = layer_norm(q + h, p['dec_ln1_g'], p['dec_ln1_b'])
    h = mha(x, mem, p['dec_ca_wq'], p['dec_ca_wk'], p['dec_ca_wv'],
            p['dec_ca_wo'], mem_pad_mask)
    x = layer_norm(x + h, p['dec_ln2_g'], p['dec_ln2_b'])
    h = jax.nn.relu(x @ p['dec_ff1']) @ p['dec_ff2']
    x = layer_norm(x + h, p['dec_ln3_g'], p['dec_ln3_b'])
    return x


# TODO(synk): ContextModel is not provided; stand-in extracts 4x4 image patches
# (NCHW input) and projects each to d_o object features -> X: [B, N_o, d_o].
def context_model(p, img):
    Bsz = img.shape[0]
    patches = img.reshape(Bsz, IMG_C, IMG_H // PATCH, PATCH, IMG_W // PATCH, PATCH)
    patches = patches.transpose(0, 2, 4, 1, 3, 5).reshape(Bsz, N_O, PATCH_DIM)
    X = patches @ p['ctx_w'] + p['ctx_b']
    return {'X': X,
            'no_answer': jnp.zeros((Bsz,), jnp.float32),
            'init_w': jnp.ones((Bsz, N_O), jnp.float32)}


def parent_model_forward(p, prompt_tokens, img):
    prompt_encoded, prompt_pad_mask = prompt_encoder(p, prompt_tokens)
    ctx = context_model(p, img)
    X = ctx['X']
    Bsz = X.shape[0]
    op_inputs = jnp.broadcast_to(p['E_ops'][None], (Bsz, N_OPS, D_W))
    w_ops = op_decoder(p, op_inputs, prompt_encoded, prompt_pad_mask)
    f1_op = w_ops[:, 0, :]                          # [B, d_w]
    # F1ModuleSimple + class_preds + log  (single-invocation Pallas kernel)
    ret = f1_pallas(f1_op, p['Wc_w'], p['Wc_b'], X)  # [B, N_o, 2]
    return ret, f1_op, X


# pure-JAX reference of the kernelized part (for verification)
def f1_reference(seed, w, b, X):
    P = seed @ w + b                                        # [B, d_c]
    logits = jnp.einsum('bod,bd->bo', X, P)                 # [B, N_o]
    xp = jax.nn.sigmoid(logits) * (1.0 - 2.0 * EPS) + EPS
    class_preds = jnp.stack([1.0 - xp, xp], axis=-1)
    return jnp.log(class_preds)


# ----------------------------- params ----------------------------------------
def init_params(key):
    ks = list(jax.random.split(key, 24))

    def nrm(shape):
        return jax.random.normal(ks.pop(), shape, jnp.float32) * 0.02

    p = {}
    p['E_c'] = nrm((N_VOCAB, D_W))
    p['E_ops'] = nrm((N_OPS, D_W))
    # encoder
    p['enc_wq'], p['enc_wk'] = nrm((D_W, D_W)), nrm((D_W, D_W))
    p['enc_wv'], p['enc_wo'] = nrm((D_W, D_W)), nrm((D_W, D_W))
    p['enc_ff1'], p['enc_ff2'] = nrm((D_W, FFN_DIM)), nrm((FFN_DIM, D_W))
    p['enc_ln1_g'], p['enc_ln1_b'] = jnp.ones((D_W,)), jnp.zeros((D_W,))
    p['enc_ln2_g'], p['enc_ln2_b'] = jnp.ones((D_W,)), jnp.zeros((D_W,))
    # decoder
    p['dec_sa_wq'], p['dec_sa_wk'] = nrm((D_W, D_W)), nrm((D_W, D_W))
    p['dec_sa_wv'], p['dec_sa_wo'] = nrm((D_W, D_W)), nrm((D_W, D_W))
    p['dec_ca_wq'], p['dec_ca_wk'] = nrm((D_W, D_W)), nrm((D_W, D_W))
    p['dec_ca_wv'], p['dec_ca_wo'] = nrm((D_W, D_W)), nrm((D_W, D_W))
    p['dec_ff1'], p['dec_ff2'] = nrm((D_W, FFN_DIM)), nrm((FFN_DIM, D_W))
    p['dec_ln1_g'], p['dec_ln1_b'] = jnp.ones((D_W,)), jnp.zeros((D_W,))
    p['dec_ln2_g'], p['dec_ln2_b'] = jnp.ones((D_W,)), jnp.zeros((D_W,))
    p['dec_ln3_g'], p['dec_ln3_b'] = jnp.ones((D_W,)), jnp.zeros((D_W,))
    # F1ModuleSimple W_concepts (stored as [d_w, d_c]; PyTorch applies x @ W.T + b)
    p['Wc_w'], p['Wc_b'] = nrm((D_W, D_C)), nrm((D_C,))
    # context-model stand-in
    p['ctx_w'] = nrm((PATCH_DIM, D_O))
    p['ctx_b'] = jnp.zeros((D_O,))
    return p


# ----------------------------- main -------------------------------------------
if __name__ == "__main__":
    key = jax.random.PRNGKey(0)
    k_tok, k_img, k_par = jax.random.split(key, 3)

    prompt_tokens = jax.random.randint(k_tok, (B, L), 2, N_VOCAB)
    prompt_tokens = prompt_tokens.at[:, -2:].set(PAD_IDX)       # a bit of padding
    img = jax.random.normal(k_img, (B, IMG_C, IMG_H, IMG_W), jnp.float32)  # NCHW

    params = init_params(k_par)

    out, f1_op, X = parent_model_forward(params, prompt_tokens, img)
    out = jax.block_until_ready(out)

    ref = jax.block_until_ready(f1_reference(f1_op, params['Wc_w'], params['Wc_b'], X))
    assert out.shape == (B, N_O, 2), out.shape
    np.testing.assert_allclose(np.asarray(out), np.asarray(ref), rtol=1e-5, atol=1e-5)

    print("KERNEL_OK")
</pallas_src>

<mosaic_0001>
module attributes {stable_mosaic.version = 11 : i64} {
  func.func @f1_kernel(%arg0: memref<2x32xf32, #tpu.memory_space<vmem>>, %arg1: memref<32x32xf32, #tpu.memory_space<vmem>>, %arg2: memref<1x32xf32, #tpu.memory_space<vmem>>, %arg3: memref<2x16x32xf32, #tpu.memory_space<vmem>>, %arg4: memref<2x2x16xf32, #tpu.memory_space<vmem>>) attributes {dimension_semantics = [], scalar_prefetch = 0 : i64, scratch_operands = 0 : i64, tpu.core_type = #tpu.core_type<tc>} {
    %c0 = arith.constant 0 : index
    %c0_0 = arith.constant 0 : index
    %0 = vector.load %arg0[%c0, %c0_0] : memref<2x32xf32, #tpu.memory_space<vmem>>, vector<2x32xf32>
    %c0_1 = arith.constant 0 : index
    %c0_2 = arith.constant 0 : index
    %1 = vector.load %arg1[%c0_1, %c0_2] : memref<32x32xf32, #tpu.memory_space<vmem>>, vector<32x32xf32>
    %cst = arith.constant dense<0.000000e+00> : vector<2x32xf32>
    %2 = tpu.matmul %0, %1, %cst {dimension_numbers = #tpu.dot_dimension_numbers<[1], [0], [0], [1], [0, 0, 1, 1], [], []>} : vector<2x32xf32>, vector<32x32xf32>, vector<2x32xf32> -> vector<2x32xf32>
    %c0_3 = arith.constant 0 : index
    %c0_4 = arith.constant 0 : index
    %3 = vector.load %arg2[%c0_3, %c0_4] : memref<1x32xf32, #tpu.memory_space<vmem>>, vector<1x32xf32>
    %4 = vector.broadcast %3 : vector<1x32xf32> to vector<2x32xf32>
    %5 = arith.addf %2, %4 : vector<2x32xf32>
    %c0_5 = arith.constant 0 : index
    %c0_6 = arith.constant 0 : index
    %c0_7 = arith.constant 0 : index
    %6 = vector.load %arg3[%c0_5, %c0_6, %c0_7] : memref<2x16x32xf32, #tpu.memory_space<vmem>>, vector<2x16x32xf32>
    %7 = vector.shape_cast %5 : vector<2x32xf32> to vector<2x1x32xf32>
    %8 = vector.broadcast %7 : vector<2x1x32xf32> to vector<2x16x32xf32>
    %9 = arith.mulf %6, %8 : vector<2x16x32xf32>
    %cst_8 = arith.constant dense<0.000000e+00> : vector<2x16xf32>
    %10 = vector.multi_reduction <add>, %9, %cst_8 [2] : vector<2x16x32xf32> to vector<2x16xf32>
    %11 = arith.negf %10 : vector<2x16xf32>
    %12 = math.exp %11 : vector<2x16xf32>
    %cst_9 = arith.constant 1.000000e+00 : f32
    %13 = vector.broadcast %cst_9 : f32 to vector<2x16xf32>
    %14 = arith.addf %13, %12 : vector<2x16xf32>
    %15 = arith.divf %13, %14 : vector<2x16xf32>
    %cst_10 = arith.constant 9.998000e-01 : f32
    %16 = vector.broadcast %cst_10 : f32 to vector<2x16xf32>
    %17 = arith.mulf %15, %16 : vector<2x16xf32>
    %cst_11 = arith.constant 9.99999974E-5 : f32
    %18 = vector.broadcast %cst_11 : f32 to vector<2x16xf32>
    %19 = arith.addf %17, %18 : vector<2x16xf32>
    %cst_12 = arith.constant 1.000000e+00 : f32
    %20 = vector.broadcast %cst_12 : f32 to vector<2x16xf32>
    %21 = arith.subf %20, %19 : vector<2x16xf32>
    %22 = math.log %21 : vector<2x16xf32>
    %c0_13 = arith.constant 0 : index
    %c0_14 = arith.constant 0 : index
    %c0_15 = arith.constant 0 : index
    %23 = vector.load %arg4[%c0_13, %c0_14, %c0_15] : memref<2x2x16xf32, #tpu.memory_space<vmem>>, vector<1x2x16xf32>
    %24 = vector.shape_cast %23 : vector<1x2x16xf32> to vector<2x16xf32>
    %25 = vector.shape_cast %22 : vector<2x16xf32> to vector<1x2x16xf32>
    tpu.vector_store %arg4[%c0_13, %c0_14, %c0_15], %25 {strides = array<i32>} : memref<2x2x16xf32, #tpu.memory_space<vmem>>, vector<1x2x16xf32>,
    %26 = math.log %19 : vector<2x16xf32>
    %c1 = arith.constant 1 : index
    %c0_16 = arith.constant 0 : index
    %c0_17 = arith.constant 0 : index
    %27 = vector.load %arg4[%c1, %c0_16, %c0_17] : memref<2x2x16xf32, #tpu.memory_space<vmem>>, vector<1x2x16xf32>
    %28 = vector.shape_cast %27 : vector<1x2x16xf32> to vector<2x16xf32>
    %29 = vector.shape_cast %26 : vector<2x16xf32> to vector<1x2x16xf32>
    tpu.vector_store %arg4[%c1, %c0_16, %c0_17], %29 {strides = array<i32>} : memref<2x2x16xf32, #tpu.memory_space<vmem>>, vector<1x2x16xf32>,
    return
  }
}

</mosaic_0001>

<llo_original>
// kernel: tpu_custom_call.1
$region0: #{tpu_custom_call.1}
  #allocation0 [shape = 'u32[]', space=smem, size = 0x4, offset = 0x4, fixed_abs, tag = 'smem constant byte address 0x4 - core index']
  #allocation1 [shape = 'u32[144,128]{1,0:T(1,128)}', space=vmem, size = 0x12000, scoped, tag = 'internal scratch']
  %s0 = inlined_call_operand.hbm [shape: f32[2,32], index: 0, kind: input, shape index: {}]
  %s1 = inlined_call_operand.hbm [shape: f32[32,32], index: 1, kind: input, shape index: {}]
  %s2 = inlined_call_operand.vmem [shape: f32[1,32], index: 2, kind: input, shape index: {}]
  %s3 = inlined_call_operand.hbm [shape: f32[2,16,32], index: 3, kind: input, shape index: {}]
  %s4 = inlined_call_operand.hbm [shape: f32[2,2,16], index: 4, kind: output, shape index: {}]
  %s5 = sld [smem:[#allocation0]]
  $region38: #{tpu_custom_call.1} parent=0
    _
  %s7 = ssub.s32 1, %s5
  %s8 = scalar_select 0, %s7, %s5
  $region1: #{tpu_custom_call.1} parent=0
    #allocation2 [shape = 'u8[1024]{0}', space=vmem, size = 0x400, scoped, tag = 'input window, operand 0, single buffered']
    #allocation3 [shape = 's32[1]{0}', space=sflag, size = 0x4, scoped, tag = 'scoped memory for tpu_custom_call.1']
    #allocation4 [shape = 's32[1]{0}', space=sflag, size = 0x4, scoped, tag = 'scoped memory for tpu_custom_call.1']
    #allocation5 [shape = 'u8[16384]{0}', space=vmem, size = 0x4000, scoped, tag = 'input window, operand 1, single buffered']
    #allocation6 [shape = 's32[1]{0}', space=sflag, size = 0x4, scoped, tag = 'scoped memory for tpu_custom_call.1']
    #allocation7 [shape = 'u8[16384]{0}', space=vmem, size = 0x4000, scoped, tag = 'input window, operand 3, single buffered']
    #allocation8 [shape = 'u8[2048]{0}', space=vmem, size = 0x800, scoped, tag = 'output window, operand 0, single buffered']
    %9 = vsyncpa [#allocation3], 0
    %10 = vsyncpa [#allocation6], 0
    %11 = vsyncpa [#allocation4], 0
    // Predicated region
    $region2: #{tpu_custom_call.1} parent=1 // pred_check
      _
    $region3: #{tpu_custom_call.1} parent=1 // pred_check_branch
      %13 = sbr.rel (0) target = $region5
    $region4: #{tpu_custom_call.1} parent=1 // pred_region
      %s15 = ssub.s32 32, 32
      %16 = vsyncadd [#allocation3], %s15
      %s18 = sshll.u32 [#allocation2], 4
      %s19 = int_to_ptr.vmem [resolvable:$true] %s18
      %21 = dma.hbm_to_vmem [thread:$0]  %s0, 32, %s19, [#allocation3]
    $region5: #{tpu_custom_call.1} parent=1 // pred_fallthru
      _
    // Predicated region
    $region6: #{tpu_custom_call.1} parent=1 // pred_check
      _
    $region7: #{tpu_custom_call.1} parent=1 // pred_check_branch
      %23 = sbr.rel (0) target = $region9
    $region8: #{tpu_custom_call.1} parent=1 // pred_region
      %s25 = ssub.s32 512, 512
      %26 = vsyncadd [#allocation6], %s25
      %s27 = sshll.u32 [#allocation5], 4
      %s28 = int_to_ptr.vmem [resolvable:$true] %s27
      %33 = dma.hbm_to_vmem [thread:$0]  %s1, 512, %s28, [#allocation6], 128, 128, 8
    $region9: #{tpu_custom_call.1} parent=1 // pred_fallthru
      _
    // Predicated region
    $region10: #{tpu_custom_call.1} parent=1 // pred_check
      _
    $region11: #{tpu_custom_call.1} parent=1 // pred_check_branch
      %35 = sbr.rel (0) target = $region13
    $region12: #{tpu_custom_call.1} parent=1 // pred_region
      _
    $region13: #{tpu_custom_call.1} parent=1 // pred_fallthru
      _
    // Predicated region
    $region14: #{tpu_custom_call.1} parent=1 // pred_check
      _
    $region15: #{tpu_custom_call.1} parent=1 // pred_check_branch
      %37 = sbr.rel (0) target = $region17
    $region16: #{tpu_custom_call.1} parent=1 // pred_region
      %s39 = ssub.s32 512, 512
      %40 = vsyncadd [#allocation6], %s39
      %s41 = sshll.u32 [#allocation7], 4
      %s42 = int_to_ptr.vmem [resolvable:$true] %s41
      %47 = dma.hbm_to_vmem [thread:$0]  %s3, 512, %s42, [#allocation6], 128, 128, 8
    $region17: #{tpu_custom_call.1} parent=1 // pred_fallthru
      _
    // Predicated region
    $region18: #{tpu_custom_call.1} parent=1 // pred_check
      _
    $region19: #{tpu_custom_call.1} parent=1 // pred_check_branch
      %49 = sbr.rel (0) target = $region21
    $region20: #{tpu_custom_call.1} parent=1 // pred_region
      %50 = dma.done [#allocation3], 32
    $region21: #{tpu_custom_call.1} parent=1 // pred_fallthru
      _
    // Predicated region
    $region22: #{tpu_custom_call.1} parent=1 // pred_check
      _
    $region23: #{tpu_custom_call.1} parent=1 // pred_check_branch
      %52 = sbr.rel (0) target = $region25
    $region24: #{tpu_custom_call.1} parent=1 // pred_region
      %53 = dma.done [#allocation6], 512
    $region25: #{tpu_custom_call.1} parent=1 // pred_fallthru
      _
    // Predicated region
    $region26: #{tpu_custom_call.1} parent=1 // pred_check
      _
    $region27: #{tpu_custom_call.1} parent=1 // pred_check_branch
      %55 = sbr.rel (0) target = $region29
    $region28: #{tpu_custom_call.1} parent=1 // pred_region
      %56 = dma.done [#allocation6], 512
    $region29: #{tpu_custom_call.1} parent=1 // pred_fallthru
      _
    %v57 = vld [vmem:[#allocation2] sm:$0x3]
    %v58 = vld [vmem:[#allocation5] sm:$0xff]
    %v59 = vld [vmem:[#allocation5 + $0x8] sm:$0xff]
    %v60 = vld [vmem:[#allocation5 + $0x10] sm:$0xff]
    %v61 = vld [vmem:[#allocation5 + $0x18] sm:$0xff]
    %v62 = vld [vmem:[%s2] sm:$0x1]
    %v64 = vlaneseq
    %v65 = vshrl.u32 %v64, 7
    %v66 = vsub.s32 0, %v65
    %v67 = vrot.slane %v62, %v66
    %vm69 = vcmask 261120
    %v71 = vsel %vm69, %v57, 0
    %73 = vmatprep.subr.mxu0 0.0
    %74 = vmatpush1.msra.mxu0 %v58
    %75 = vmatprep.subr.mxu0 0.0
    %76 = vmatpush1.msra.mxu0 %v59
    %77 = vmatprep.subr.mxu0 0.0
    %78 = vmatpush1.msra.mxu0 %v60
    %79 = vmatprep.subr.mxu0 0.0
    %80 = vmatpush1.msra.mxu0 %v61
    %81 = vmatprep.subr.mxu0 0.0
    %82 = vmatpush1.msra.mxu0 0.0
    %83 = vmatprep.subr.mxu0 0.0
    %84 = vmatpush1.msra.mxu0 0.0
    %85 = vmatprep.subr.mxu0 0.0
    %86 = vmatpush1.msra.mxu0 0.0
    %87 = vmatprep.subr.mxu0 0.0
    %88 = vmatpush1.msra.mxu0 0.0
    %89 = vmatprep.subr.mxu0 0.0
    %90 = vmatpush1.msra.mxu0 0.0
    %91 = vmatprep.subr.mxu0 0.0
    %92 = vmatpush1.msra.mxu0 0.0
    %93 = vmatprep.subr.mxu0 0.0
    %94 = vmatpush1.msra.mxu0 0.0
    %95 = vmatprep.subr.mxu0 0.0
    %96 = vmatpush1.msra.mxu0 0.0
    %97 = vmatprep.subr.mxu0 0.0
    %98 = vmatpush1.msra.mxu0 0.0
    %99 = vmatprep.subr.mxu0 0.0
    %100 = vmatpush1.msra.mxu0 0.0
    %101 = vmatprep.subr.mxu0 0.0
    %102 = vmatpush1.msra.mxu0 0.0
    %103 = vmatprep.subr.mxu0 0.0
    %104 = vmatpush1.msra.mxu0 0.0
    %105 = vmatprep.subr.mxu0 0.0
    %106 = vmatpush1.msra.mxu0 0.0
    %107 = vmatprep.subr.mxu0 0.0
    %108 = vmatpush1.msra.mxu0 0.0
    %109 = vmatprep.subr.mxu0 0.0
    %110 = vmatpush1.msra.mxu0 0.0
    %111 = vmatprep.subr.mxu0 0.0
    %112 = vmatpush1.msra.mxu0 0.0
    %113 = vmatprep.subr.mxu0 0.0
    %114 = vmatpush1.msra.mxu0 0.0
    %115 = vmatprep.subr.mxu0 0.0
    %116 = vmatpush1.msra.mxu0 0.0
    %117 = vmatprep.subr.mxu0 0.0
    %118 = vmatpush1.msra.mxu0 0.0
    %119 = vmatprep.subr.mxu0 0.0
    %120 = vmatpush1.msra.mxu0 0.0
    %121 = vmatprep.subr.mxu0 0.0
    %122 = vmatpush1.msra.mxu0 0.0
    %123 = vmatprep.subr.mxu0 0.0
    %124 = vmatpush1.msra.mxu0 0.0
    %125 = vmatprep.subr.mxu0 0.0
    %126 = vmatpush1.msra.mxu0 0.0
    %127 = vmatprep.subr.mxu0 0.0
    %128 = vmatpush1.msra.mxu0 0.0
    %129 = vmatprep.subr.mxu0 0.0
    %130 = vmatpush1.msra.mxu0 0.0
    %131 = vmatprep.subr.mxu0 0.0
    %132 = vmatpush1.msra.mxu0 0.0
    %133 = vmatprep.subr.mxu0 0.0
    %134 = vmatpush1.msra.mxu0 0.0
    %135 = vmatprep.subr.mxu0 0.0
    %136 = vmatpush1.msra.mxu0 0.0
    %137 = vmatprep.mubr.f32.mxu0 0.0
    %138 = vmatmul.mubr.f32.gmra.mrb[0].mxu0 %v71
    %v139 = vpop.f32.mrb[0].mxu0
    %v140 = vadd.f32 %v67, %v139
    %v141 = vpop.f32.mrb[0].mxu0
    %142 = vdwg.mxu0
    %v143 = vld [vmem:[#allocation7] sm:$0xff]
    %v144 = vld [vmem:[#allocation7 + $0x8] sm:$0xff]
    %v145 = vld [vmem:[#allocation7 + $0x10] sm:$0xff]
    %v146 = vld [vmem:[#allocation7 + $0x18] sm:$0xff]
    %v149 = vunpack.c.l.s4 1966171168
    %v150 = vunpack.c.0.s8 %v149
    %v151 = vlaneseq
    %v152 = vshrl.u32 %v151, 7
    %v153 = vsub.s32 %v150, %v152
    %v154 = vrot.slane %v140, %v153
    %v155 = vcombine.high %v154, %v154
    %v157 = vunpack.c.l.s4 1966171168
    %v158 = vunpack.c.0.s8 %v157
    %v159 = vlaneseq
    %v160 = vshrl.u32 %v159, 7
    %v161 = vsub.s32 %v158, %v160
    %v162 = vrot.slane %v154, %v161
    %v164 = vunpack.c.l.s4 1966171168
    %v165 = vunpack.c.0.s8 %v164
    %v166 = vlaneseq
    %v167 = vshrl.u32 %v166, 7
    %v168 = vsub.s32 %v165, %v167
    %v169 = vrot.slane %v155, %v168
    %v170 = vlaneseq
    %v171 = vshrl.u32 %v170, 7
    %v172 = vsub.s32 0, %v171
    %v173 = vrot.slane %v162, %v172
    %v174 = vlaneseq
    %v175 = vshrl.u32 %v174, 7
    %v176 = vsub.s32 0, %v175
    %v177 = vrot.slane %v169, %v176
    %v180 = vmul.f32 %v143, %v173
    %v181 = vmul.f32 %v144, %v173
    %v182 = vmul.f32 %v145, %v177
    %v183 = vmul.f32 %v146, %v177
    %v184 = vsel %vm69, %v180, 0.0
    %185 = vadd.xlane.f32.xlu0 %v184
    %v186 = vpop.xlane.xlu0 %185
    %v187 = vsel %vm69, %v181, 0.0
    %188 = vadd.xlane.f32.xlu0 %v187
    %v189 = vpop.xlane.xlu0 %188
    %v190 = vsel %vm69, %v182, 0.0
    %191 = vadd.xlane.f32.xlu0 %v190
    %v192 = vpop.xlane.xlu0 %191
    %v193 = vsel %vm69, %v183, 0.0
    %194 = vadd.xlane.f32.xlu0 %v193
    %v195 = vpop.xlane.xlu0 %194
    %v196 = vxor.u32 %v186, 2147483648
    %v197 = vxor.u32 %v189, 2147483648
    %v198 = vxor.u32 %v192, 2147483648
    %v199 = vxor.u32 %v195, 2147483648
    %v200 = vmul.f32 %v196, 1.442695
    %v201 = vpow.pop %v200
    %v202 = vmul.f32 %v197, 1.442695
    %v203 = vpow.pop %v202
    %v204 = vmul.f32 %v198, 1.442695
    %v205 = vpow.pop %v204
    %v206 = vmul.f32 %v199, 1.442695
    %v207 = vpow.pop %v206
    %v208 = vadd.f32 %v201, 1.0
    %v209 = vadd.f32 %v203, 1.0
    %v210 = vadd.f32 %v205, 1.0
    %v211 = vadd.f32 %v207, 1.0
    %v212 = vrcp.pop %v208
    %v213 = vmul.f32 1.0, %v212
    %v214 = vrcp.pop %v209
    %v215 = vmul.f32 1.0, %v214
    %v216 = vrcp.pop %v210
    %v217 = vmul.f32 1.0, %v216
    %v218 = vrcp.pop %v211
    %v219 = vmul.f32 1.0, %v218
    %v220 = vmul.f32 %v213, 0.9998
    %v221 = vmul.f32 %v215, 0.9998
    %v222 = vmul.f32 %v217, 0.9998
    %v223 = vmul.f32 %v219, 0.9998
    %v224 = vadd.f32 %v220, 0.0001
    %v225 = vadd.f32 %v221, 0.0001
    %v226 = vadd.f32 %v222, 0.0001
    %v227 = vadd.f32 %v223, 0.0001
    %v228 = vsub.f32 1.0, %v224
    %v229 = vsub.f32 1.0, %v225
    %v230 = vsub.f32 1.0, %v226
    %v231 = vsub.f32 1.0, %v227
    %v232 = vlog2.pop %v228
    %v233 = vmul.f32 %v232, 0.6931472
    %v234 = vlog2.pop %v229
    %v235 = vmul.f32 %v234, 0.6931472
    %v236 = vlog2.pop %v230
    %v237 = vmul.f32 %v236, 0.6931472
    %v238 = vlog2.pop %v231
    %v239 = vmul.f32 %v238, 0.6931472
    %v244 = vlaneseq
    %v245 = vand.u32 %v244, 127
    %v246 = vlaneseq
    %v247 = vshrl.u32 %v246, 7
    %v248 = vsub.s32 %v245, %v247
    %v249 = vrot.slane %v233, %v248
    %v250 = vadd.s32 %v245, 4294967288
    %v251 = vlaneseq
    %v252 = vshrl.u32 %v251, 7
    %v253 = vsub.s32 %v250, %v252
    %v254 = vrot.slane %v235, %v253
    %vm255 = vcmask 130112
    %v256 = vsel %vm255, %v254, %v249
    %v257 = vlaneseq
    %v258 = vshrl.u32 %v257, 7
    %v259 = vsub.s32 %v245, %v258
    %v260 = vrot.slane %v237, %v259
    %v261 = vlaneseq
    %v262 = vshrl.u32 %v261, 7
    %v263 = vsub.s32 %v250, %v262
    %v264 = vrot.slane %v239, %v263
    %v265 = vsel %vm255, %v264, %v260
    %vm266 = vcmask 1041409
    %v267 = vsel %vm266, %v265, %v256
    %vm269 = vcmask 123904
    %270 = vst.msk [vmem:[#allocation8] sm:$0x3] %vm269, %v267
    %v271 = vlog2.pop %v224
    %v272 = vmul.f32 %v271, 0.6931472
    %v273 = vlog2.pop %v225
    %v274 = vmul.f32 %v273, 0.6931472
    %v275 = vlog2.pop %v226
    %v276 = vmul.f32 %v275, 0.6931472
    %v277 = vlog2.pop %v227
    %v278 = vmul.f32 %v277, 0.6931472
    %v283 = vlaneseq
    %v284 = vshrl.u32 %v283, 7
    %v285 = vsub.s32 %v245, %v284
    %v286 = vrot.slane %v272, %v285
    %v287 = vlaneseq
    %v288 = vshrl.u32 %v287, 7
    %v289 = vsub.s32 %v250, %v288
    %v290 = vrot.slane %v274, %v289
    %v291 = vsel %vm255, %v290, %v286
    %v292 = vlaneseq
    %v293 = vshrl.u32 %v292, 7
    %v294 = vsub.s32 %v245, %v293
    %v295 = vrot.slane %v276, %v294
    %v296 = vlaneseq
    %v297 = vshrl.u32 %v296, 7
    %v298 = vsub.s32 %v250, %v297
    %v299 = vrot.slane %v278, %v298
    %v300 = vsel %vm255, %v299, %v295
    %v301 = vsel %vm266, %v300, %v291
    %s303 = scalar_lea.vmem [#allocation8], 2
    %304 = vst.msk [vmem:[%s303] sm:$0x3] %vm269, %v301
    // Predicated region
    $region30: #{tpu_custom_call.1} parent=1 // pred_check
      _
    $region31: #{tpu_custom_call.1} parent=1 // pred_check_branch
      %306 = sbr.rel (0) target = $region33
    $region32: #{tpu_custom_call.1} parent=1 // pred_region
      %s308 = ssub.s32 64, 64
      %309 = vsyncadd [#allocation4], %s308
      %s310 = sshll.u32 [#allocation8], 4
      %s311 = int_to_ptr.vmem [resolvable:$true] %s310
      %316 = dma.vmem_to_hbm [thread:$0]  %s311, 64, %s4, [#allocation4], 32, 32, 2
    $region33: #{tpu_custom_call.1} parent=1 // pred_fallthru
      _
    // Predicated region
    $region34: #{tpu_custom_call.1} parent=1 // pred_check
      _
    $region35: #{tpu_custom_call.1} parent=1 // pred_check_branch
      %318 = sbr.rel (0) target = $region37
    $region36: #{tpu_custom_call.1} parent=1 // pred_region
      %319 = dma.done [#allocation4], 64
    $region37: #{tpu_custom_call.1} parent=1 // pred_fallthru
      _
    %320 = vsyncpa [#allocation3], 1
    %321 = vsyncpa [#allocation6], 1
    %322 = vsyncpa [#allocation4], 1

</llo_original>
